<compile_context>
chip_gen: v5e
topology: v5e:2x2
jax: 0.10.0
libtpu: 0.0.40
codegen_flags: <defaults>
</compile_context>

<pallas_src>
import jax
import jax.numpy as jnp
from jax import lax
from jax.experimental import pallas as pl
from jax.experimental.pallas import tpu as pltpu


def _combined_loss_kernel(cls_logits_ref, cls_tgt_ref, loc_pred_ref, loc_tgt_ref,
                          cls_sum_ref, cls_cnt_ref, loc_cnt_ref, loc_sum_ref):
    """Accumulate masked-CE and masked-SmoothL1 partial sums for one row tile."""
    k = pl.program_id(1)  # inner (row-reduction) axis

    @pl.when(k == 0)
    def _init():
        cls_sum_ref[...] = jnp.zeros_like(cls_sum_ref)
        cls_cnt_ref[...] = jnp.zeros_like(cls_cnt_ref)
        loc_cnt_ref[...] = jnp.zeros_like(loc_cnt_ref)
        loc_sum_ref[...] = jnp.zeros_like(loc_sum_ref)

    # ---- masked cross entropy (reduction='none' -> masked sum / count) ----
    logits = cls_logits_ref[...].astype(jnp.float32)          # [TN, C]
    tgt = cls_tgt_ref[...]                                     # [TN, 1] int32
    tn, c = logits.shape

    row_max = jnp.max(logits, axis=-1, keepdims=True)          # [TN, 1]
    shifted = logits - row_max                                 # [TN, C]
    lse = jnp.log(jnp.sum(jnp.exp(shifted), axis=-1, keepdims=True))    # [TN, 1]
    col_ids = lax.broadcasted_iota(jnp.int32, (tn, c), 1)      # [TN, C]
    # TODO(synk): out-of-range class indices silently give picked=0 (PyTorch would raise).
    picked = jnp.sum(jnp.where(col_ids == tgt, shifted, 0.0),
                     axis=-1, keepdims=True)                   # [TN, 1]
    ce = lse - picked                                          # -log_softmax[target]

    cls_mask = (tgt != 0).astype(jnp.float32)                  # [TN, 1]
    cls_sum_ref[...] += jnp.sum(ce * cls_mask, axis=(0, 1), keepdims=True)
    cls_cnt_ref[...] += jnp.sum(cls_mask, axis=(0, 1), keepdims=True)

    # ---- masked smooth L1 (beta = 1.0), lane-dense [4, TN] layout ----
    preds = loc_pred_ref[...].astype(jnp.float32)              # [4, TN]
    tloc = loc_tgt_ref[...].astype(jnp.float32)                # [4, TN]
    loc_mask = jnp.max((tloc != 0.0).astype(jnp.float32),
                       axis=0, keepdims=True)                  # [1, TN]
    d = (preds - tloc) * loc_mask                              # == p*m - t*m
    ad = jnp.abs(d)
    sl1 = jnp.where(ad < 1.0, 0.5 * d * d, ad - 0.5)           # [4, TN]
    loc_sum_ref[...] += jnp.sum(sl1, axis=1, keepdims=True)    # [4, 1] per-coordinate
    loc_cnt_ref[...] += jnp.sum(loc_mask, axis=(0, 1), keepdims=True)


def _round_up(x, m):
    return ((x + m - 1) // m) * m


def combined_loss(cls_preds, loc_preds, cls_targets, loc_targets,
                  cls_weight=0.5, loc_weight=0.5,
                  block_rows=1024, num_splits=None):
    """cls_preds [B,S,C], loc_preds [B,S,4], cls_targets [B,S] int, loc_targets [B,S,4].

    Returns the length-4 combined loss (scalar CE broadcast against per-coord SmoothL1),
    matching the PyTorch CombinedLoss forward.
    """
    b, s, c = cls_preds.shape
    n = b * s

    # Keep native dtypes (no HBM f32 pre-cast); the kernel casts each tile to f32.
    logits = cls_preds.reshape(n, c)
    tgt = cls_targets.reshape(n, 1).astype(jnp.int32)
    lp = jnp.transpose(loc_preds.reshape(n, 4))            # [4, N] lane-dense
    lt = jnp.transpose(loc_targets.reshape(n, 4))          # [4, N] lane-dense

    itemsize = jnp.dtype(logits.dtype).itemsize
    # Bound the logits tile to ~4 MiB so double-buffering fits every chip's
    # default scoped VMEM limit with headroom.
    budget_rows = (4 * 1024 * 1024) // max(1, c * itemsize)
    budget_rows = max(128, (budget_rows // 128) * 128)
    tn = min(block_rows, budget_rows, _round_up(n, 128))
    tn = max(128, (tn // 128) * 128)                       # multiple of 128 rows

    steps_total = pl.cdiv(n, tn)
    if num_splits is None:
        # Row split across TensorCores (v7x has 2); harmless on 1-TC chips.
        num_splits = 2 if steps_total >= 4 else 1
    steps = pl.cdiv(steps_total, num_splits)
    n_pad = num_splits * steps * tn

    pad = n_pad - n
    if pad:
        # Padded rows have class target 0 and all-zero boxes, so both masks drop them.
        logits = jnp.pad(logits, ((0, pad), (0, 0)))
        tgt = jnp.pad(tgt, ((0, pad), (0, 0)))
        lp = jnp.pad(lp, ((0, 0), (0, pad)))
        lt = jnp.pad(lt, ((0, 0), (0, pad)))

    in_specs = [
        pl.BlockSpec((tn, c), lambda j, k: (j * steps + k, 0)),   # logits
        pl.BlockSpec((tn, 1), lambda j, k: (j * steps + k, 0)),   # class targets
        pl.BlockSpec((4, tn), lambda j, k: (0, j * steps + k)),   # loc preds
        pl.BlockSpec((4, tn), lambda j, k: (0, j * steps + k)),   # loc targets
    ]
    out_shape = (
        jax.ShapeDtypeStruct((num_splits, 1, 1), jnp.float32),    # cls_sum partials
        jax.ShapeDtypeStruct((num_splits, 1, 1), jnp.float32),    # cls_cnt partials
        jax.ShapeDtypeStruct((num_splits, 1, 1), jnp.float32),    # loc_cnt partials
        jax.ShapeDtypeStruct((num_splits, 4, 1), jnp.float32),    # loc_sum partials
    )
    out_specs = (
        pl.BlockSpec((None, 1, 1), lambda j, k: (j, 0, 0)),
        pl.BlockSpec((None, 1, 1), lambda j, k: (j, 0, 0)),
        pl.BlockSpec((None, 1, 1), lambda j, k: (j, 0, 0)),
        pl.BlockSpec((None, 4, 1), lambda j, k: (j, 0, 0)),
    )

    # Rough VMEM need for the double-buffered input blocks; raise the scoped
    # limit only when a very large C pushes past the defaults (v5e: 16 MiB).
    est_vmem = 2 * (tn * c * itemsize          # logits
                    + tn * 128 * 4             # lane-padded [TN,1] int32 targets
                    + 2 * 8 * tn * 4)          # [4,TN] loc preds+targets (8-sublane pad)
    compiler_kwargs = dict(dimension_semantics=("parallel", "arbitrary"))
    if est_vmem > 12 * 1024 * 1024:
        compiler_kwargs["vmem_limit_bytes"] = min(est_vmem + (8 << 20), 64 << 20)

    cost = pl.CostEstimate(
        flops=8 * n_pad * c + 64 * n_pad,
        transcendentals=n_pad * (c + 1),
        bytes_accessed=n_pad * c * itemsize + n_pad * 4
                       + 2 * 4 * n_pad * jnp.dtype(lp.dtype).itemsize,
    )

    cls_sum_p, cls_cnt_p, loc_cnt_p, loc_sum_p = pl.pallas_call(
        _combined_loss_kernel,
        out_shape=out_shape,
        grid=(num_splits, steps),
        in_specs=in_specs,
        out_specs=out_specs,
        compiler_params=pltpu.CompilerParams(**compiler_kwargs),
        cost_estimate=cost,
    )(logits, tgt, lp, lt)

    # Tiny finalize in plain JAX (combine per-split partials, divide, weight).
    cls_sum = jnp.sum(cls_sum_p)
    cls_cnt = jnp.sum(cls_cnt_p)
    loc_cnt = jnp.sum(loc_cnt_p)
    loc_sum = jnp.sum(loc_sum_p, axis=(0, 2))               # [4]

    cls_loss = cls_sum / jnp.maximum(cls_cnt, 1.0)          # scalar
    loc_loss = loc_sum / jnp.maximum(loc_cnt, 1.0)          # [4]
    return cls_weight * cls_loss + loc_weight * loc_loss    # [4]


def _reference(cls_preds, loc_preds, cls_targets, loc_targets,
               cls_weight=0.5, loc_weight=0.5):
    b, s, c = cls_preds.shape
    logits = cls_preds.reshape(-1, c).astype(jnp.float32)
    tgt = cls_targets.reshape(-1).astype(jnp.int32)
    logp = jax.nn.log_softmax(logits, axis=-1)
    ce = -jnp.take_along_axis(logp, tgt[:, None], axis=-1)[:, 0]
    cls_mask = (tgt != 0).astype(jnp.float32)
    cls_loss = jnp.sum(ce * cls_mask) / jnp.maximum(jnp.sum(cls_mask), 1.0)

    lp = loc_preds.reshape(-1, 4).astype(jnp.float32)
    lt = loc_targets.reshape(-1, 4).astype(jnp.float32)
    loc_mask = jnp.any(lt != 0.0, axis=-1, keepdims=True).astype(jnp.float32)
    d = lp * loc_mask - lt * loc_mask
    ad = jnp.abs(d)
    sl1 = jnp.where(ad < 1.0, 0.5 * d * d, ad - 0.5)
    loc_loss = jnp.sum(sl1, axis=0) / jnp.maximum(jnp.sum(loc_mask), 1.0)
    return cls_weight * cls_loss + loc_weight * loc_loss


if __name__ == "__main__":
    key = jax.random.PRNGKey(0)
    k1, k2, k3, k4, k5 = jax.random.split(key, 5)

    # Small shapes implied by the module: batch=2, seq=8, classes=32.
    B, S, C = 2, 8, 32
    cls_preds = jax.random.normal(k1, (B, S, C), dtype=jnp.float32)
    loc_preds = jax.random.normal(k2, (B, S, 4), dtype=jnp.float32)
    cls_targets = jax.random.randint(k3, (B, S), 0, C, dtype=jnp.int32)
    loc_targets = jax.random.normal(k4, (B, S, 4), dtype=jnp.float32)
    zero_rows = jax.random.bernoulli(k5, 0.3, (B, S, 1))
    loc_targets = jnp.where(zero_rows, 0.0, loc_targets)

    out = combined_loss(cls_preds, loc_preds, cls_targets, loc_targets,
                        cls_weight=0.5, loc_weight=0.5)
    out = jax.block_until_ready(out)
    ref = _reference(cls_preds, loc_preds, cls_targets, loc_targets)
    assert out.shape == (4,)
    assert jnp.allclose(out, ref, rtol=1e-5, atol=1e-5), (out, ref)

    # Larger case: exercises the multi-step pipelined grid, the 2-way
    # TensorCore row split, and the row-padding path.
    B2, S2 = 8, 640                                  # N = 5120 rows
    kk = jax.random.split(jax.random.PRNGKey(1), 5)
    cls_p2 = jax.random.normal(kk[0], (B2, S2, C), dtype=jnp.float32)
    loc_p2 = jax.random.normal(kk[1], (B2, S2, 4), dtype=jnp.float32)
    cls_t2 = jax.random.randint(kk[2], (B2, S2), 0, C, dtype=jnp.int32)
    loc_t2 = jax.random.normal(kk[3], (B2, S2, 4), dtype=jnp.float32)
    loc_t2 = jnp.where(jax.random.bernoulli(kk[4], 0.3, (B2, S2, 1)), 0.0, loc_t2)
    out2 = jax.block_until_ready(combined_loss(cls_p2, loc_p2, cls_t2, loc_t2))
    ref2 = _reference(cls_p2, loc_p2, cls_t2, loc_t2)
    assert out2.shape == (4,)
    assert jnp.allclose(out2, ref2, rtol=1e-4, atol=1e-4), (out2, ref2)

    print("KERNEL_OK")
</pallas_src>

<mosaic_0001>
module attributes {stable_mosaic.version = 11 : i64} {
  func.func @_combined_loss_kernel(%arg0: i32, %arg1: i32, %arg2: memref<128x32xf32, #tpu.memory_space<vmem>>, %arg3: memref<128x1xi32, #tpu.memory_space<vmem>>, %arg4: memref<4x128xf32, #tpu.memory_space<vmem>>, %arg5: memref<4x128xf32, #tpu.memory_space<vmem>>, %arg6: memref<1x1x1xf32, #tpu.memory_space<vmem>>, %arg7: memref<1x1x1xf32, #tpu.memory_space<vmem>>, %arg8: memref<1x1x1xf32, #tpu.memory_space<vmem>>, %arg9: memref<1x4x1xf32, #tpu.memory_space<vmem>>) attributes {dimension_semantics = [#tpu.dimension_semantics<parallel>, #tpu.dimension_semantics<arbitrary>], iteration_bounds = array<i64: 1, 1>, scalar_prefetch = 0 : i64, scratch_operands = 0 : i64, tpu.core_type = #tpu.core_type<tc>, window_params = [{transform_indices = @transform_0, window_bounds = array<i64: 128, 32>}, {transform_indices = @transform_1, window_bounds = array<i64: 128, 1>}, {transform_indices = @transform_2, window_bounds = array<i64: 4, 128>}, {transform_indices = @transform_3, window_bounds = array<i64: 4, 128>}, {transform_indices = @transform_4, window_bounds = array<i64: 1, 1, 1>}, {transform_indices = @transform_5, window_bounds = array<i64: 1, 1, 1>}, {transform_indices = @transform_6, window_bounds = array<i64: 1, 1, 1>}, {transform_indices = @transform_7, window_bounds = array<i64: 1, 4, 1>}]} {
    %c0_i32 = arith.constant 0 : i32
    %0 = arith.cmpi eq, %arg1, %c0_i32 : i32
    %1 = arith.extui %0 : i1 to i32
    %c0_i32_0 = arith.constant 0 : i32
    %2 = arith.cmpi ne, %1, %c0_i32_0 : i32
    scf.if %2 {
      %cst_45 = arith.constant 0.000000e+00 : f32
      %87 = vector.broadcast %cst_45 : f32 to vector<1x1xf32>
      %c0_46 = arith.constant 0 : index
      %c0_47 = arith.constant 0 : index
      %c0_48 = arith.constant 0 : index
      %88 = vector.load %arg6[%c0_46, %c0_47, %c0_48] : memref<1x1x1xf32, #tpu.memory_space<vmem>>, vector<1x1x1xf32>
      %89 = vector.shape_cast %88 : vector<1x1x1xf32> to vector<1x1xf32>
      %90 = vector.shape_cast %87 : vector<1x1xf32> to vector<1x1x1xf32>
      tpu.vector_store %arg6[%c0_46, %c0_47, %c0_48], %90 {strides = array<i32>} : memref<1x1x1xf32, #tpu.memory_space<vmem>>, vector<1x1x1xf32>,
      %cst_49 = arith.constant 0.000000e+00 : f32
      %91 = vector.broadcast %cst_49 : f32 to vector<1x1xf32>
      %c0_50 = arith.constant 0 : index
      %c0_51 = arith.constant 0 : index
      %c0_52 = arith.constant 0 : index
      %92 = vector.load %arg7[%c0_50, %c0_51, %c0_52] : memref<1x1x1xf32, #tpu.memory_space<vmem>>, vector<1x1x1xf32>
      %93 = vector.shape_cast %92 : vector<1x1x1xf32> to vector<1x1xf32>
      %94 = vector.shape_cast %91 : vector<1x1xf32> to vector<1x1x1xf32>
      tpu.vector_store %arg7[%c0_50, %c0_51, %c0_52], %94 {strides = array<i32>} : memref<1x1x1xf32, #tpu.memory_space<vmem>>, vector<1x1x1xf32>,
      %cst_53 = arith.constant 0.000000e+00 : f32
      %95 = vector.broadcast %cst_53 : f32 to vector<1x1xf32>
      %c0_54 = arith.constant 0 : index
      %c0_55 = arith.constant 0 : index
      %c0_56 = arith.constant 0 : index
      %96 = vector.load %arg8[%c0_54, %c0_55, %c0_56] : memref<1x1x1xf32, #tpu.memory_space<vmem>>, vector<1x1x1xf32>
      %97 = vector.shape_cast %96 : vector<1x1x1xf32> to vector<1x1xf32>
      %98 = vector.shape_cast %95 : vector<1x1xf32> to vector<1x1x1xf32>
      tpu.vector_store %arg8[%c0_54, %c0_55, %c0_56], %98 {strides = array<i32>} : memref<1x1x1xf32, #tpu.memory_space<vmem>>, vector<1x1x1xf32>,
      %cst_57 = arith.constant 0.000000e+00 : f32
      %99 = vector.broadcast %cst_57 : f32 to vector<4x1xf32>
      %c0_58 = arith.constant 0 : index
      %c0_59 = arith.constant 0 : index
      %c0_60 = arith.constant 0 : index
      %100 = vector.load %arg9[%c0_58, %c0_59, %c0_60] : memref<1x4x1xf32, #tpu.memory_space<vmem>>, vector<1x4x1xf32>
      %101 = vector.shape_cast %100 : vector<1x4x1xf32> to vector<4x1xf32>
      %102 = vector.shape_cast %99 : vector<4x1xf32> to vector<1x4x1xf32>
      tpu.vector_store %arg9[%c0_58, %c0_59, %c0_60], %102 {strides = array<i32>} : memref<1x4x1xf32, #tpu.memory_space<vmem>>, vector<1x4x1xf32>,
    } else {
    }
    %c0 = arith.constant 0 : index
    %c0_1 = arith.constant 0 : index
    %3 = vector.load %arg2[%c0, %c0_1] : memref<128x32xf32, #tpu.memory_space<vmem>>, vector<128x32xf32>
    %c0_2 = arith.constant 0 : index
    %c0_3 = arith.constant 0 : index
    %4 = vector.load %arg3[%c0_2, %c0_3] : memref<128x1xi32, #tpu.memory_space<vmem>>, vector<128x1xi32>
    %cst = arith.constant dense<0xFF800000> : vector<128xf32>
    %5 = vector.multi_reduction <maximumf>, %3, %cst [1] : vector<128x32xf32> to vector<128xf32>
    %6 = vector.shape_cast %5 : vector<128xf32> to vector<128x1xf32>
    %7 = vector.broadcast %6 : vector<128x1xf32> to vector<128x32xf32>
    %8 = arith.subf %3, %7 : vector<128x32xf32>
    %9 = math.exp %8 : vector<128x32xf32>
    %cst_4 = arith.constant dense<0.000000e+00> : vector<128xf32>
    %10 = vector.multi_reduction <add>, %9, %cst_4 [1] : vector<128x32xf32> to vector<128xf32>
    %11 = vector.shape_cast %10 : vector<128xf32> to vector<128x1xf32>
    %12 = math.log %11 : vector<128x1xf32>
    %13 = tpu.iota {dimensions = array<i32: 1>} : vector<128x32xi32>
    %14 = vector.broadcast %4 : vector<128x1xi32> to vector<128x32xi32>
    %15 = arith.cmpi eq, %13, %14 : vector<128x32xi32>
    %cst_5 = arith.constant 0.000000e+00 : f32
    %16 = vector.broadcast %cst_5 : f32 to vector<128x32xf32>
    %17 = arith.select %15, %8, %16 : vector<128x32xi1>, vector<128x32xf32>
    %cst_6 = arith.constant dense<0.000000e+00> : vector<128xf32>
    %18 = vector.multi_reduction <add>, %17, %cst_6 [1] : vector<128x32xf32> to vector<128xf32>
    %19 = vector.shape_cast %18 : vector<128xf32> to vector<128x1xf32>
    %20 = arith.subf %12, %19 : vector<128x1xf32>
    %c0_i32_7 = arith.constant 0 : i32
    %21 = vector.broadcast %c0_i32_7 : i32 to vector<128x1xi32>
    %22 = arith.cmpi ne, %4, %21 : vector<128x1xi32>
    %23 = arith.extui %22 : vector<128x1xi1> to vector<128x1xi32>
    %24 = arith.sitofp %23 : vector<128x1xi32> to vector<128x1xf32>
    %c0_8 = arith.constant 0 : index
    %c0_9 = arith.constant 0 : index
    %c0_10 = arith.constant 0 : index
    %25 = vector.load %arg6[%c0_8, %c0_9, %c0_10] : memref<1x1x1xf32, #tpu.memory_space<vmem>>, vector<1x1x1xf32>
    %26 = vector.shape_cast %25 : vector<1x1x1xf32> to vector<1x1xf32>
    %27 = arith.mulf %20, %24 : vector<128x1xf32>
    %28 = vector.shape_cast %27 : vector<128x1xf32> to vector<1x128x1xf32>
    %cst_11 = arith.constant dense<0.000000e+00> : vector<1xf32>
    %29 = vector.multi_reduction <add>, %28, %cst_11 [1, 2] : vector<1x128x1xf32> to vector<1xf32>
    %30 = vector.shape_cast %29 : vector<1xf32> to vector<1x1x1xf32>
    %31 = vector.extract %30[0, 0, 0] : f32 from vector<1x1x1xf32>
    %32 = vector.broadcast %31 : f32 to vector<1x1xf32>
    %33 = arith.addf %26, %32 : vector<1x1xf32>
    %c0_12 = arith.constant 0 : index
    %c0_13 = arith.constant 0 : index
    %c0_14 = arith.constant 0 : index
    %34 = vector.load %arg6[%c0_12, %c0_13, %c0_14] : memref<1x1x1xf32, #tpu.memory_space<vmem>>, vector<1x1x1xf32>
    %35 = vector.shape_cast %34 : vector<1x1x1xf32> to vector<1x1xf32>
    %36 = vector.shape_cast %33 : vector<1x1xf32> to vector<1x1x1xf32>
    tpu.vector_store %arg6[%c0_12, %c0_13, %c0_14], %36 {strides = array<i32>} : memref<1x1x1xf32, #tpu.memory_space<vmem>>, vector<1x1x1xf32>,
    %c0_15 = arith.constant 0 : index
    %c0_16 = arith.constant 0 : index
    %c0_17 = arith.constant 0 : index
    %37 = vector.load %arg7[%c0_15, %c0_16, %c0_17] : memref<1x1x1xf32, #tpu.memory_space<vmem>>, vector<1x1x1xf32>
    %38 = vector.shape_cast %37 : vector<1x1x1xf32> to vector<1x1xf32>
    %39 = vector.shape_cast %24 : vector<128x1xf32> to vector<1x128x1xf32>
    %cst_18 = arith.constant dense<0.000000e+00> : vector<1xf32>
    %40 = vector.multi_reduction <add>, %39, %cst_18 [1, 2] : vector<1x128x1xf32> to vector<1xf32>
    %41 = vector.shape_cast %40 : vector<1xf32> to vector<1x1x1xf32>
    %42 = vector.extract %41[0, 0, 0] : f32 from vector<1x1x1xf32>
    %43 = vector.broadcast %42 : f32 to vector<1x1xf32>
    %44 = arith.addf %38, %43 : vector<1x1xf32>
    %c0_19 = arith.constant 0 : index
    %c0_20 = arith.constant 0 : index
    %c0_21 = arith.constant 0 : index
    %45 = vector.load %arg7[%c0_19, %c0_20, %c0_21] : memref<1x1x1xf32, #tpu.memory_space<vmem>>, vector<1x1x1xf32>
    %46 = vector.shape_cast %45 : vector<1x1x1xf32> to vector<1x1xf32>
    %47 = vector.shape_cast %44 : vector<1x1xf32> to vector<1x1x1xf32>
    tpu.vector_store %arg7[%c0_19, %c0_20, %c0_21], %47 {strides = array<i32>} : memref<1x1x1xf32, #tpu.memory_space<vmem>>, vector<1x1x1xf32>,
    %c0_22 = arith.constant 0 : index
    %c0_23 = arith.constant 0 : index
    %48 = vector.load %arg4[%c0_22, %c0_23] : memref<4x128xf32, #tpu.memory_space<vmem>>, vector<4x128xf32>
    %c0_24 = arith.constant 0 : index
    %c0_25 = arith.constant 0 : index
    %49 = vector.load %arg5[%c0_24, %c0_25] : memref<4x128xf32, #tpu.memory_space<vmem>>, vector<4x128xf32>
    %cst_26 = arith.constant 0.000000e+00 : f32
    %50 = vector.broadcast %cst_26 : f32 to vector<4x128xf32>
    %51 = arith.cmpf one, %49, %50 : vector<4x128xf32>
    %52 = arith.extui %51 : vector<4x128xi1> to vector<4x128xi32>
    %53 = arith.sitofp %52 : vector<4x128xi32> to vector<4x128xf32>
    %cst_27 = arith.constant dense<0xFF800000> : vector<128xf32>
    %54 = vector.multi_reduction <maximumf>, %53, %cst_27 [0] : vector<4x128xf32> to vector<128xf32>
    %55 = vector.shape_cast %54 : vector<128xf32> to vector<1x128xf32>
    %56 = arith.subf %48, %49 : vector<4x128xf32>
    %57 = vector.broadcast %55 : vector<1x128xf32> to vector<4x128xf32>
    %58 = arith.mulf %56, %57 : vector<4x128xf32>
    %59 = math.absf %58 : vector<4x128xf32>
    %cst_28 = arith.constant 1.000000e+00 : f32
    %60 = vector.broadcast %cst_28 : f32 to vector<4x128xf32>
    %61 = arith.cmpf olt, %59, %60 : vector<4x128xf32>
    %cst_29 = arith.constant 5.000000e-01 : f32
    %62 = vector.broadcast %cst_29 : f32 to vector<4x128xf32>
    %63 = arith.mulf %62, %58 : vector<4x128xf32>
    %64 = arith.mulf %63, %58 : vector<4x128xf32>
    %cst_30 = arith.constant 5.000000e-01 : f32
    %65 = vector.broadcast %cst_30 : f32 to vector<4x128xf32>
    %66 = arith.subf %59, %65 : vector<4x128xf32>
    %67 = arith.select %61, %64, %66 : vector<4x128xi1>, vector<4x128xf32>
    %c0_31 = arith.constant 0 : index
    %c0_32 = arith.constant 0 : index
    %c0_33 = arith.constant 0 : index
    %68 = vector.load %arg9[%c0_31, %c0_32, %c0_33] : memref<1x4x1xf32, #tpu.memory_space<vmem>>, vector<1x4x1xf32>
    %69 = vector.shape_cast %68 : vector<1x4x1xf32> to vector<4x1xf32>
    %cst_34 = arith.constant dense<0.000000e+00> : vector<4xf32>
    %70 = vector.multi_reduction <add>, %67, %cst_34 [1] : vector<4x128xf32> to vector<4xf32>
    %71 = vector.shape_cast %70 : vector<4xf32> to vector<4x1xf32>
    %72 = arith.addf %69, %71 : vector<4x1xf32>
    %c0_35 = arith.constant 0 : index
    %c0_36 = arith.constant 0 : index
    %c0_37 = arith.constant 0 : index
    %73 = vector.load %arg9[%c0_35, %c0_36, %c0_37] : memref<1x4x1xf32, #tpu.memory_space<vmem>>, vector<1x4x1xf32>
    %74 = vector.shape_cast %73 : vector<1x4x1xf32> to vector<4x1xf32>
    %75 = vector.shape_cast %72 : vector<4x1xf32> to vector<1x4x1xf32>
    tpu.vector_store %arg9[%c0_35, %c0_36, %c0_37], %75 {strides = array<i32>} : memref<1x4x1xf32, #tpu.memory_space<vmem>>, vector<1x4x1xf32>,
    %c0_38 = arith.constant 0 : index
    %c0_39 = arith.constant 0 : index
    %c0_40 = arith.constant 0 : index
    %76 = vector.load %arg8[%c0_38, %c0_39, %c0_40] : memref<1x1x1xf32, #tpu.memory_space<vmem>>, vector<1x1x1xf32>
    %77 = vector.shape_cast %76 : vector<1x1x1xf32> to vector<1x1xf32>
    %78 = vector.shape_cast %55 : vector<1x128xf32> to vector<1x1x128xf32>
    %cst_41 = arith.constant dense<0.000000e+00> : vector<1xf32>
    %79 = vector.multi_reduction <add>, %78, %cst_41 [1, 2] : vector<1x1x128xf32> to vector<1xf32>
    %80 = vector.shape_cast %79 : vector<1xf32> to vector<1x1x1xf32>
    %81 = vector.extract %80[0, 0, 0] : f32 from vector<1x1x1xf32>
    %82 = vector.broadcast %81 : f32 to vector<1x1xf32>
    %83 = arith.addf %77, %82 : vector<1x1xf32>
    %c0_42 = arith.constant 0 : index
    %c0_43 = arith.constant 0 : index
    %c0_44 = arith.constant 0 : index
    %84 = vector.load %arg8[%c0_42, %c0_43, %c0_44] : memref<1x1x1xf32, #tpu.memory_space<vmem>>, vector<1x1x1xf32>
    %85 = vector.shape_cast %84 : vector<1x1x1xf32> to vector<1x1xf32>
    %86 = vector.shape_cast %83 : vector<1x1xf32> to vector<1x1x1xf32>
    tpu.vector_store %arg8[%c0_42, %c0_43, %c0_44], %86 {strides = array<i32>} : memref<1x1x1xf32, #tpu.memory_space<vmem>>, vector<1x1x1xf32>,
    return
  }
  func.func @transform_0(%arg0: i32, %arg1: i32) -> (i32, i32) {
    %c1_i32 = arith.constant 1 : i32
    %0 = arith.muli %arg0, %c1_i32 : i32
    %1 = arith.addi %0, %arg1 : i32
    %c0_i32 = arith.constant 0 : i32
    %c0_i32_0 = arith.constant 0 : i32
    return %1, %c0_i32 : i32, i32
  }
  func.func @transform_1(%arg0: i32, %arg1: i32) -> (i32, i32) {
    %c1_i32 = arith.constant 1 : i32
    %0 = arith.muli %arg0, %c1_i32 : i32
    %1 = arith.addi %0, %arg1 : i32
    %c0_i32 = arith.constant 0 : i32
    %c0_i32_0 = arith.constant 0 : i32
    return %1, %c0_i32 : i32, i32
  }
  func.func @transform_2(%arg0: i32, %arg1: i32) -> (i32, i32) {
    %c1_i32 = arith.constant 1 : i32
    %0 = arith.muli %arg0, %c1_i32 : i32
    %1 = arith.addi %0, %arg1 : i32
    %c0_i32 = arith.constant 0 : i32
    %c0_i32_0 = arith.constant 0 : i32
    return %c0_i32, %1 : i32, i32
  }
  func.func @transform_3(%arg0: i32, %arg1: i32) -> (i32, i32) {
    %c1_i32 = arith.constant 1 : i32
    %0 = arith.muli %arg0, %c1_i32 : i32
    %1 = arith.addi %0, %arg1 : i32
    %c0_i32 = arith.constant 0 : i32
    %c0_i32_0 = arith.constant 0 : i32
    return %c0_i32, %1 : i32, i32
  }
  func.func @transform_4(%arg0: i32, %arg1: i32) -> (i32, i32, i32) {
    %c0_i32 = arith.constant 0 : i32
    %c0_i32_0 = arith.constant 0 : i32
    %c0_i32_1 = arith.constant 0 : i32
    return %arg0, %c0_i32, %c0_i32_0 : i32, i32, i32
  }
  func.func @transform_5(%arg0: i32, %arg1: i32) -> (i32, i32, i32) {
    %c0_i32 = arith.constant 0 : i32
    %c0_i32_0 = arith.constant 0 : i32
    %c0_i32_1 = arith.constant 0 : i32
    return %arg0, %c0_i32, %c0_i32_0 : i32, i32, i32
  }
  func.func @transform_6(%arg0: i32, %arg1: i32) -> (i32, i32, i32) {
    %c0_i32 = arith.constant 0 : i32
    %c0_i32_0 = arith.constant 0 : i32
    %c0_i32_1 = arith.constant 0 : i32
    return %arg0, %c0_i32, %c0_i32_0 : i32, i32, i32
  }
  func.func @transform_7(%arg0: i32, %arg1: i32) -> (i32, i32, i32) {
    %c0_i32 = arith.constant 0 : i32
    %c0_i32_0 = arith.constant 0 : i32
    %c0_i32_1 = arith.constant 0 : i32
    return %arg0, %c0_i32, %c0_i32_0 : i32, i32, i32
  }
}

</mosaic_0001>

<llo_original>
// kernel: tpu_custom_call.1
$region0: #{tpu_custom_call.1}
  #allocation0 [shape = 'u32[]', space=smem, size = 0x4, offset = 0x4, fixed_abs, tag = 'smem constant byte address 0x4 - core index']
  #allocation1 [shape = 'u32[72,128]{1,0:T(1,128)}', space=vmem, size = 0x9000, scoped, tag = 'internal scratch']
  %s0 = inlined_call_operand.vmem [shape: f32[128,32], index: 0, kind: input, shape index: {}]
  %s1 = inlined_call_operand.vmem [shape: s32[128,1], index: 1, kind: input, shape index: {}]
  %s2 = inlined_call_operand.vmem [shape: f32[4,128], index: 2, kind: input, shape index: {}]
  %s3 = inlined_call_operand.vmem [shape: f32[4,128], index: 3, kind: input, shape index: {}]
  %s4 = inlined_call_operand.hbm [shape: f32[1,1,1], index: 4, kind: output, shape index: {0}]
  %s5 = inlined_call_operand.hbm [shape: f32[1,1,1], index: 5, kind: output, shape index: {1}]
  %s6 = inlined_call_operand.hbm [shape: f32[1,1,1], index: 6, kind: output, shape index: {2}]
  %s7 = inlined_call_operand.vmem [shape: f32[1,4,1], index: 7, kind: output, shape index: {3}]
  %8 = xla_tuple %s4, %s5, %s6, %s7
  %s9 = sld [smem:[#allocation0]]
  $region54: #{tpu_custom_call.1} parent=0
    _
  %s11 = ssub.s32 1, %s9
  %s12 = scalar_select 0, %s11, %s9
  $region1: #{tpu_custom_call.1} parent=0
    #allocation2 [shape = 'u8[512]{0}', space=vmem, size = 0x400, scoped, tag = 'output window, operand 0, single buffered']
    #allocation3 [shape = 's32[1]{0}', space=sflag, size = 0x4, scoped, tag = 'scoped memory for tpu_custom_call.1']
    #allocation4 [shape = 'u8[512]{0}', space=vmem, size = 0x400, scoped, tag = 'output window, operand 1, single buffered']
    #allocation5 [shape = 's32[1]{0}', space=sflag, size = 0x4, scoped, tag = 'scoped memory for tpu_custom_call.1']
    #allocation6 [shape = 'u8[512]{0}', space=vmem, size = 0x400, scoped, tag = 'output window, operand 2, single buffered']
    %13 = vsyncpa [#allocation3], 0
    %14 = vsyncpa [#allocation5], 0
    // Predicated region
    $region2: #{tpu_custom_call.1} parent=1 // pred_check
      _
    $region3: #{tpu_custom_call.1} parent=1 // pred_check_branch
      %16 = sbr.rel (0) target = $region5
    $region4: #{tpu_custom_call.1} parent=1 // pred_region
      %s17 = sadd.s32 0, 0
      %s18 = smul.u32 16, %s17
      %p19 = scmp.lt.s32.totalorder %s18, 15
      %s20 = scalar_select %p19, %s18, 15
      %s21 = smul.addr %s20, 8
      %s22 = scalar_lea.vmem %s0, %s21
      %s23 = sadd.s32 0, 0
      %s24 = smul.u32 16, %s23
    $region5: #{tpu_custom_call.1} parent=1 // pred_fallthru
      _
    // Predicated region
    $region6: #{tpu_custom_call.1} parent=1 // pred_check
      _
    $region7: #{tpu_custom_call.1} parent=1 // pred_check_branch
      %26 = sbr.rel (0) target = $region9
    $region8: #{tpu_custom_call.1} parent=1 // pred_region
      %s27 = sadd.s32 0, 0
      %s28 = smul.u32 16, %s27
      %p29 = scmp.lt.s32.totalorder %s28, 15
      %s30 = scalar_select %p29, %s28, 15
      %s31 = smul.addr %s30, 8
      %s32 = scalar_lea.vmem %s1, %s31
      %s33 = sadd.s32 0, 0
      %s34 = smul.u32 16, %s33
    $region9: #{tpu_custom_call.1} parent=1 // pred_fallthru
      _
    // Predicated region
    $region10: #{tpu_custom_call.1} parent=1 // pred_check
      _
    $region11: #{tpu_custom_call.1} parent=1 // pred_check_branch
      %36 = sbr.rel (0) target = $region13
    $region12: #{tpu_custom_call.1} parent=1 // pred_region
      %s37 = sadd.s32 0, 0
      %p38 = scmp.lt.s32.totalorder %s37, 0
      %s39 = scalar_select %p38, %s37, 0
      %s40 = smul.addr %s39, 4
      %s41 = scalar_lea.vmem %s2, %s40
      %s42 = sadd.s32 0, 0
    $region13: #{tpu_custom_call.1} parent=1 // pred_fallthru
      _
    // Predicated region
    $region14: #{tpu_custom_call.1} parent=1 // pred_check
      _
    $region15: #{tpu_custom_call.1} parent=1 // pred_check_branch
      %44 = sbr.rel (0) target = $region17
    $region16: #{tpu_custom_call.1} parent=1 // pred_region
      %s45 = sadd.s32 0, 0
      %p46 = scmp.lt.s32.totalorder %s45, 0
      %s47 = scalar_select %p46, %s45, 0
      %s48 = smul.addr %s47, 4
      %s49 = scalar_lea.vmem %s3, %s48
      %s50 = sadd.s32 0, 0
    $region17: #{tpu_custom_call.1} parent=1 // pred_fallthru
      _
    %s51 = sadd.s32 0, 0
    %s52 = smul.u32 16, %s51
    %p53 = scmp.lt.s32.totalorder %s52, 15
    %s54 = scalar_select %p53, %s52, 15
    %s55 = smul.addr %s54, 8
    %s56 = scalar_lea.vmem %s0, %s55
    %s57 = sadd.s32 0, 0
    %s58 = smul.u32 16, %s57
    %p59 = scmp.lt.s32.totalorder %s58, 15
    %s60 = scalar_select %p59, %s58, 15
    %s61 = smul.addr %s60, 8
    %s62 = scalar_lea.vmem %s1, %s61
    %s63 = sadd.s32 0, 0
    %p64 = scmp.lt.s32.totalorder %s63, 0
    %s65 = scalar_select %p64, %s63, 0
    %s66 = smul.addr %s65, 4
    %s67 = scalar_lea.vmem %s2, %s66
    %s68 = sadd.s32 0, 0
    %p69 = scmp.lt.s32.totalorder %s68, 0
    %s70 = scalar_select %p69, %s68, 0
    %s71 = smul.addr %s70, 4
    %s72 = scalar_lea.vmem %s3, %s71
    %s73 = sadd.s32 0, 0
    %s74 = smul.u32 16, %s73
    %p75 = scmp.lt.s32.totalorder %s74, 15
    %s76 = scalar_select %p75, %s74, 15
    %s77 = smul.addr %s76, 8
    %s78 = scalar_lea.vmem %s0, %s77
    %s79 = sadd.s32 0, 0
    %s80 = smul.u32 16, %s79
    %s81 = sadd.s32 0, 0
    %s82 = smul.u32 16, %s81
    %p83 = scmp.lt.s32.totalorder %s82, 15
    %s84 = scalar_select %p83, %s82, 15
    %s85 = smul.addr %s84, 8
    %s86 = scalar_lea.vmem %s1, %s85
    %s87 = sadd.s32 0, 0
    %s88 = smul.u32 16, %s87
    %s89 = sadd.s32 0, 0
    %p90 = scmp.lt.s32.totalorder %s89, 0
    %s91 = scalar_select %p90, %s89, 0
    %s92 = smul.addr %s91, 4
    %s93 = scalar_lea.vmem %s2, %s92
    %s94 = sadd.s32 0, 0
    %s95 = sadd.s32 0, 0
    %p96 = scmp.lt.s32.totalorder %s95, 0
    %s97 = scalar_select %p96, %s95, 0
    %s98 = smul.addr %s97, 4
    %s99 = scalar_lea.vmem %s3, %s98
    %s100 = sadd.s32 0, 0
    %p101 = scmp.eq.s32.totalorder 0, 0
    // Predicated region
    $region18: #{tpu_custom_call.1} parent=1 // pred_check
      %p102 = pneg %p101
    $region19: #{tpu_custom_call.1} parent=1 // pred_check_branch
      %104 = sbr.rel (%p102) target = $region21
    $region20: #{tpu_custom_call.1} parent=1 // pred_region
      %vm105 = vcmask 0
      %106 = vst.msk [vmem:[#allocation2] sm:$0x1] %vm105, 0.0
      %107 = vst.msk [vmem:[#allocation4] sm:$0x1] %vm105, 0.0
      %108 = vst.msk [vmem:[#allocation6] sm:$0x1] %vm105, 0.0
      %vm109 = vcmask 3072
      %110 = vst.msk [vmem:[%s7] sm:$0xf] %vm109, 0.0
    $region21: #{tpu_custom_call.1} parent=1 // pred_fallthru
      _
    %v111 = vld [vmem:[%s78] sm:$0xff]
    %v112 = vld [vmem:[%s78 + $0x8] sm:$0xff]
    %v113 = vld [vmem:[%s78 + $0x10] sm:$0xff]
    %v114 = vld [vmem:[%s78 + $0x18] sm:$0xff]
    %v115 = vld [vmem:[%s78 + $0x20] sm:$0xff]
    %v116 = vld [vmem:[%s78 + $0x28] sm:$0xff]
    %v117 = vld [vmem:[%s78 + $0x30] sm:$0xff]
    %v118 = vld [vmem:[%s78 + $0x38] sm:$0xff]
    %v119 = vld [vmem:[%s78 + $0x40] sm:$0xff]
    %v120 = vld [vmem:[%s78 + $0x48] sm:$0xff]
    %v121 = vld [vmem:[%s78 + $0x50] sm:$0xff]
    %v122 = vld [vmem:[%s78 + $0x58] sm:$0xff]
    %v123 = vld [vmem:[%s78 + $0x60] sm:$0xff]
    %v124 = vld [vmem:[%s78 + $0x68] sm:$0xff]
    %v125 = vld [vmem:[%s78 + $0x70] sm:$0xff]
    %v126 = vld [vmem:[%s78 + $0x78] sm:$0xff]
    %v127 = vld [vmem:[%s86] sm:$0xff]
    %v128 = vld [vmem:[%s86 + $0x8] sm:$0xff]
    %v129 = vld [vmem:[%s86 + $0x10] sm:$0xff]
    %v130 = vld [vmem:[%s86 + $0x18] sm:$0xff]
    %v131 = vld [vmem:[%s86 + $0x20] sm:$0xff]
    %v132 = vld [vmem:[%s86 + $0x28] sm:$0xff]
    %v133 = vld [vmem:[%s86 + $0x30] sm:$0xff]
    %v134 = vld [vmem:[%s86 + $0x38] sm:$0xff]
    %v135 = vld [vmem:[%s86 + $0x40] sm:$0xff]
    %v136 = vld [vmem:[%s86 + $0x48] sm:$0xff]
    %v137 = vld [vmem:[%s86 + $0x50] sm:$0xff]
    %v138 = vld [vmem:[%s86 + $0x58] sm:$0xff]
    %v139 = vld [vmem:[%s86 + $0x60] sm:$0xff]
    %v140 = vld [vmem:[%s86 + $0x68] sm:$0xff]
    %v141 = vld [vmem:[%s86 + $0x70] sm:$0xff]
    %v142 = vld [vmem:[%s86 + $0x78] sm:$0xff]
    %vm143 = vcmask 261120
    %v144 = vsel %vm143, %v111, -inf
    %145 = vmax.xlane.f32.xlu0 %v144
    %v146 = vpop.xlane.xlu0 %145
    %v147 = vsel %vm143, %v112, -inf
    %148 = vmax.xlane.f32.xlu0 %v147
    %v149 = vpop.xlane.xlu0 %148
    %v150 = vsel %vm143, %v113, -inf
    %151 = vmax.xlane.f32.xlu0 %v150
    %v152 = vpop.xlane.xlu0 %151
    %v153 = vsel %vm143, %v114, -inf
    %154 = vmax.xlane.f32.xlu0 %v153
    %v155 = vpop.xlane.xlu0 %154
    %v156 = vsel %vm143, %v115, -inf
    %157 = vmax.xlane.f32.xlu0 %v156
    %v158 = vpop.xlane.xlu0 %157
    %v159 = vsel %vm143, %v116, -inf
    %160 = vmax.xlane.f32.xlu0 %v159
    %v161 = vpop.xlane.xlu0 %160
    %v162 = vsel %vm143, %v117, -inf
    %163 = vmax.xlane.f32.xlu0 %v162
    %v164 = vpop.xlane.xlu0 %163
    %v165 = vsel %vm143, %v118, -inf
    %166 = vmax.xlane.f32.xlu0 %v165
    %v167 = vpop.xlane.xlu0 %166
    %v168 = vsel %vm143, %v119, -inf
    %169 = vmax.xlane.f32.xlu0 %v168
    %v170 = vpop.xlane.xlu0 %169
    %v171 = vsel %vm143, %v120, -inf
    %172 = vmax.xlane.f32.xlu0 %v171
    %v173 = vpop.xlane.xlu0 %172
    %v174 = vsel %vm143, %v121, -inf
    %175 = vmax.xlane.f32.xlu0 %v174
    %v176 = vpop.xlane.xlu0 %175
    %v177 = vsel %vm143, %v122, -inf
    %178 = vmax.xlane.f32.xlu0 %v177
    %v179 = vpop.xlane.xlu0 %178
    %v180 = vsel %vm143, %v123, -inf
    %181 = vmax.xlane.f32.xlu0 %v180
    %v182 = vpop.xlane.xlu0 %181
    %v183 = vsel %vm143, %v124, -inf
    %184 = vmax.xlane.f32.xlu0 %v183
    %v185 = vpop.xlane.xlu0 %184
    %v186 = vsel %vm143, %v125, -inf
    %187 = vmax.xlane.f32.xlu0 %v186
    %v188 = vpop.xlane.xlu0 %187
    %v189 = vsel %vm143, %v126, -inf
    %190 = vmax.xlane.f32.xlu0 %v189
    %v191 = vpop.xlane.xlu0 %190
    %v192 = vsub.f32 %v111, %v146
    %v193 = vsub.f32 %v112, %v149
    %v194 = vsub.f32 %v113, %v152
    %v195 = vsub.f32 %v114, %v155
    %v196 = vsub.f32 %v115, %v158
    %v197 = vsub.f32 %v116, %v161
    %v198 = vsub.f32 %v117, %v164
    %v199 = vsub.f32 %v118, %v167
    %v200 = vsub.f32 %v119, %v170
    %v201 = vsub.f32 %v120, %v173
    %v202 = vsub.f32 %v121, %v176
    %v203 = vsub.f32 %v122, %v179
    %v204 = vsub.f32 %v123, %v182
    %v205 = vsub.f32 %v124, %v185
    %v206 = vsub.f32 %v125, %v188
    %v207 = vsub.f32 %v126, %v191
    %v208 = vmul.f32 %v192, 1.442695
    %v209 = vpow.pop %v208
    %v210 = vmul.f32 %v193, 1.442695
    %v211 = vpow.pop %v210
    %v212 = vmul.f32 %v194, 1.442695
    %v213 = vpow.pop %v212
    %v214 = vmul.f32 %v195, 1.442695
    %v215 = vpow.pop %v214
    %v216 = vmul.f32 %v196, 1.442695
    %v217 = vpow.pop %v216
    %v218 = vmul.f32 %v197, 1.442695
    %v219 = vpow.pop %v218
    %v220 = vmul.f32 %v198, 1.442695
    %v221 = vpow.pop %v220
    %v222 = vmul.f32 %v199, 1.442695
    %v223 = vpow.pop %v222
    %v224 = vmul.f32 %v200, 1.442695
    %v225 = vpow.pop %v224
    %v226 = vmul.f32 %v201, 1.442695
    %v227 = vpow.pop %v226
    %v228 = vmul.f32 %v202, 1.442695
    %v229 = vpow.pop %v228
    %v230 = vmul.f32 %v203, 1.442695
    %v231 = vpow.pop %v230
    %v232 = vmul.f32 %v204, 1.442695
    %v233 = vpow.pop %v232
    %v234 = vmul.f32 %v205, 1.442695
    %v235 = vpow.pop %v234
    %v236 = vmul.f32 %v206, 1.442695
    %v237 = vpow.pop %v236
    %v238 = vmul.f32 %v207, 1.442695
    %v239 = vpow.pop %v238
    %v240 = vsel %vm143, %v209, 0.0
    %241 = vadd.xlane.f32.xlu0 %v240
    %v242 = vpop.xlane.xlu0 %241
    %v243 = vsel %vm143, %v211, 0.0
    %244 = vadd.xlane.f32.xlu0 %v243
    %v245 = vpop.xlane.xlu0 %244
    %v246 = vsel %vm143, %v213, 0.0
    %247 = vadd.xlane.f32.xlu0 %v246
    %v248 = vpop.xlane.xlu0 %247
    %v249 = vsel %vm143, %v215, 0.0
    %250 = vadd.xlane.f32.xlu0 %v249
    %v251 = vpop.xlane.xlu0 %250
    %v252 = vsel %vm143, %v217, 0.0
    %253 = vadd.xlane.f32.xlu0 %v252
    %v254 = vpop.xlane.xlu0 %253
    %v255 = vsel %vm143, %v219, 0.0
    %256 = vadd.xlane.f32.xlu0 %v255
    %v257 = vpop.xlane.xlu0 %256
    %v258 = vsel %vm143, %v221, 0.0
    %259 = vadd.xlane.f32.xlu0 %v258
    %v260 = vpop.xlane.xlu0 %259
    %v261 = vsel %vm143, %v223, 0.0
    %262 = vadd.xlane.f32.xlu0 %v261
    %v263 = vpop.xlane.xlu0 %262
    %v264 = vsel %vm143, %v225, 0.0
    %265 = vadd.xlane.f32.xlu0 %v264
    %v266 = vpop.xlane.xlu0 %265
    %v267 = vsel %vm143, %v227, 0.0
    %268 = vadd.xlane.f32.xlu0 %v267
    %v269 = vpop.xlane.xlu0 %268
    %v270 = vsel %vm143, %v229, 0.0
    %271 = vadd.xlane.f32.xlu0 %v270
    %v272 = vpop.xlane.xlu0 %271
    %v273 = vsel %vm143, %v231, 0.0
    %274 = vadd.xlane.f32.xlu0 %v273
    %v275 = vpop.xlane.xlu0 %274
    %v276 = vsel %vm143, %v233, 0.0
    %277 = vadd.xlane.f32.xlu0 %v276
    %v278 = vpop.xlane.xlu0 %277
    %v279 = vsel %vm143, %v235, 0.0
    %280 = vadd.xlane.f32.xlu0 %v279
    %v281 = vpop.xlane.xlu0 %280
    %v282 = vsel %vm143, %v237, 0.0
    %283 = vadd.xlane.f32.xlu0 %v282
    %v284 = vpop.xlane.xlu0 %283
    %v285 = vsel %vm143, %v239, 0.0
    %286 = vadd.xlane.f32.xlu0 %v285
    %v287 = vpop.xlane.xlu0 %286
    %v288 = vlog2.pop %v242
    %v289 = vmul.f32 %v288, 0.6931472
    %v290 = vlog2.pop %v245
    %v291 = vmul.f32 %v290, 0.6931472
    %v292 = vlog2.pop %v248
    %v293 = vmul.f32 %v292, 0.6931472
    %v294 = vlog2.pop %v251
    %v295 = vmul.f32 %v294, 0.6931472
    %v296 = vlog2.pop %v254
    %v297 = vmul.f32 %v296, 0.6931472
    %v298 = vlog2.pop %v257
    %v299 = vmul.f32 %v298, 0.6931472
    %v300 = vlog2.pop %v260
    %v301 = vmul.f32 %v300, 0.6931472
    %v302 = vlog2.pop %v263
    %v303 = vmul.f32 %v302, 0.6931472
    %v304 = vlog2.pop %v266
    %v305 = vmul.f32 %v304, 0.6931472
    %v306 = vlog2.pop %v269
    %v307 = vmul.f32 %v306, 0.6931472
    %v308 = vlog2.pop %v272
    %v309 = vmul.f32 %v308, 0.6931472
    %v310 = vlog2.pop %v275
    %v311 = vmul.f32 %v310, 0.6931472
    %v312 = vlog2.pop %v278
    %v313 = vmul.f32 %v312, 0.6931472
    %v314 = vlog2.pop %v281
    %v315 = vmul.f32 %v314, 0.6931472
    %v316 = vlog2.pop %v284
    %v317 = vmul.f32 %v316, 0.6931472
    %v318 = vlog2.pop %v287
    %v319 = vmul.f32 %v318, 0.6931472
    %v320 = vlaneseq
    %v321 = vand.u32 %v320, 127
    %322 = vset.pattern.permute.xlu0 0
    %323 = vperm.xlu0 %322, %v127
    %v324 = vpop.permute.xlu0 %323
    %325 = vset.pattern.permute.xlu0 0
    %326 = vperm.xlu0 %325, %v128
    %v327 = vpop.permute.xlu0 %326
    %328 = vset.pattern.permute.xlu0 0
    %329 = vperm.xlu0 %328, %v129
    %v330 = vpop.permute.xlu0 %329
    %331 = vset.pattern.permute.xlu0 0
    %332 = vperm.xlu0 %331, %v130
    %v333 = vpop.permute.xlu0 %332
    %334 = vset.pattern.permute.xlu0 0
    %335 = vperm.xlu0 %334, %v131
    %v336 = vpop.permute.xlu0 %335
    %337 = vset.pattern.permute.xlu0 0
    %338 = vperm.xlu0 %337, %v132
    %v339 = vpop.permute.xlu0 %338
    %340 = vset.pattern.permute.xlu0 0
    %341 = vperm.xlu0 %340, %v133
    %v342 = vpop.permute.xlu0 %341
    %343 = vset.pattern.permute.xlu0 0
    %344 = vperm.xlu0 %343, %v134
    %v345 = vpop.permute.xlu0 %344
    %346 = vset.pattern.permute.xlu0 0
    %347 = vperm.xlu0 %346, %v135
    %v348 = vpop.permute.xlu0 %347
    %349 = vset.pattern.permute.xlu0 0
    %350 = vperm.xlu0 %349, %v136
    %v351 = vpop.permute.xlu0 %350
    %352 = vset.pattern.permute.xlu0 0
    %353 = vperm.xlu0 %352, %v137
    %v354 = vpop.permute.xlu0 %353
    %355 = vset.pattern.permute.xlu0 0
    %356 = vperm.xlu0 %355, %v138
    %v357 = vpop.permute.xlu0 %356
    %358 = vset.pattern.permute.xlu0 0
    %359 = vperm.xlu0 %358, %v139
    %v360 = vpop.permute.xlu0 %359
    %361 = vset.pattern.permute.xlu0 0
    %362 = vperm.xlu0 %361, %v140
    %v363 = vpop.permute.xlu0 %362
    %364 = vset.pattern.permute.xlu0 0
    %365 = vperm.xlu0 %364, %v141
    %v366 = vpop.permute.xlu0 %365
    %367 = vset.pattern.permute.xlu0 0
    %368 = vperm.xlu0 %367, %v142
    %v369 = vpop.permute.xlu0 %368
    %vm370 = vcmp.eq.s32.totalorder %v321, %v324
    %vm371 = vcmp.eq.s32.totalorder %v321, %v327
    %vm372 = vcmp.eq.s32.totalorder %v321, %v330
    %vm373 = vcmp.eq.s32.totalorder %v321, %v333
    %vm374 = vcmp.eq.s32.totalorder %v321, %v336
    %vm375 = vcmp.eq.s32.totalorder %v321, %v339
    %vm376 = vcmp.eq.s32.totalorder %v321, %v342
    %vm377 = vcmp.eq.s32.totalorder %v321, %v345
    %vm378 = vcmp.eq.s32.totalorder %v321, %v348
    %vm379 = vcmp.eq.s32.totalorder %v321, %v351
    %vm380 = vcmp.eq.s32.totalorder %v321, %v354
    %vm381 = vcmp.eq.s32.totalorder %v321, %v357
    %vm382 = vcmp.eq.s32.totalorder %v321, %v360
    %vm383 = vcmp.eq.s32.totalorder %v321, %v363
    %vm384 = vcmp.eq.s32.totalorder %v321, %v366
    %vm385 = vcmp.eq.s32.totalorder %v321, %v369
    %v386 = vsel %vm370, %v192, 0.0
    %v387 = vsel %vm371, %v193, 0.0
    %v388 = vsel %vm372, %v194, 0.0
    %v389 = vsel %vm373, %v195, 0.0
    %v390 = vsel %vm374, %v196, 0.0
    %v391 = vsel %vm375, %v197, 0.0
    %v392 = vsel %vm376, %v198, 0.0
    %v393 = vsel %vm377, %v199, 0.0
    %v394 = vsel %vm378, %v200, 0.0
    %v395 = vsel %vm379, %v201, 0.0
    %v396 = vsel %vm380, %v202, 0.0
    %v397 = vsel %vm381, %v203, 0.0
    %v398 = vsel %vm382, %v204, 0.0
    %v399 = vsel %vm383, %v205, 0.0
    %v400 = vsel %vm384, %v206, 0.0
    %v401 = vsel %vm385, %v207, 0.0
    %v402 = vsel %vm143, %v386, 0.0
    %403 = vadd.xlane.f32.xlu0 %v402
    %v404 = vpop.xlane.xlu0 %403
    %v405 = vsel %vm143, %v387, 0.0
    %406 = vadd.xlane.f32.xlu0 %v405
    %v407 = vpop.xlane.xlu0 %406
    %v408 = vsel %vm143, %v388, 0.0
    %409 = vadd.xlane.f32.xlu0 %v408
    %v410 = vpop.xlane.xlu0 %409
    %v411 = vsel %vm143, %v389, 0.0
    %412 = vadd.xlane.f32.xlu0 %v411
    %v413 = vpop.xlane.xlu0 %412
    %v414 = vsel %vm143, %v390, 0.0
    %415 = vadd.xlane.f32.xlu0 %v414
    %v416 = vpop.xlane.xlu0 %415
    %v417 = vsel %vm143, %v391, 0.0
    %418 = vadd.xlane.f32.xlu0 %v417
    %v419 = vpop.xlane.xlu0 %418
    %v420 = vsel %vm143, %v392, 0.0
    %421 = vadd.xlane.f32.xlu0 %v420
    %v422 = vpop.xlane.xlu0 %421
    %v423 = vsel %vm143, %v393, 0.0
    %424 = vadd.xlane.f32.xlu0 %v423
    %v425 = vpop.xlane.xlu0 %424
    %v426 = vsel %vm143, %v394, 0.0
    %427 = vadd.xlane.f32.xlu0 %v426
    %v428 = vpop.xlane.xlu0 %427
    %v429 = vsel %vm143, %v395, 0.0
    %430 = vadd.xlane.f32.xlu0 %v429
    %v431 = vpop.xlane.xlu0 %430
    %v432 = vsel %vm143, %v396, 0.0
    %433 = vadd.xlane.f32.xlu0 %v432
    %v434 = vpop.xlane.xlu0 %433
    %v435 = vsel %vm143, %v397, 0.0
    %436 = vadd.xlane.f32.xlu0 %v435
    %v437 = vpop.xlane.xlu0 %436
    %v438 = vsel %vm143, %v398, 0.0
    %439 = vadd.xlane.f32.xlu0 %v438
    %v440 = vpop.xlane.xlu0 %439
    %v441 = vsel %vm143, %v399, 0.0
    %442 = vadd.xlane.f32.xlu0 %v441
    %v443 = vpop.xlane.xlu0 %442
    %v444 = vsel %vm143, %v400, 0.0
    %445 = vadd.xlane.f32.xlu0 %v444
    %v446 = vpop.xlane.xlu0 %445
    %v447 = vsel %vm143, %v401, 0.0
    %448 = vadd.xlane.f32.xlu0 %v447
    %v449 = vpop.xlane.xlu0 %448
    %v450 = vsub.f32 %v289, %v404
    %v451 = vsub.f32 %v291, %v407
    %v452 = vsub.f32 %v293, %v410
    %v453 = vsub.f32 %v295, %v413
    %v454 = vsub.f32 %v297, %v416
    %v455 = vsub.f32 %v299, %v419
    %v456 = vsub.f32 %v301, %v422
    %v457 = vsub.f32 %v303, %v425
    %v458 = vsub.f32 %v305, %v428
    %v459 = vsub.f32 %v307, %v431
    %v460 = vsub.f32 %v309, %v434
    %v461 = vsub.f32 %v311, %v437
    %v462 = vsub.f32 %v313, %v440
    %v463 = vsub.f32 %v315, %v443
    %v464 = vsub.f32 %v317, %v446
    %v465 = vsub.f32 %v319, %v449
    %vm466 = vcmp.ne.s32.totalorder %v127, 0
    %vm467 = vcmp.ne.s32.totalorder %v128, 0
    %vm468 = vcmp.ne.s32.totalorder %v129, 0
    %vm469 = vcmp.ne.s32.totalorder %v130, 0
    %vm470 = vcmp.ne.s32.totalorder %v131, 0
    %vm471 = vcmp.ne.s32.totalorder %v132, 0
    %vm472 = vcmp.ne.s32.totalorder %v133, 0
    %vm473 = vcmp.ne.s32.totalorder %v134, 0
    %vm474 = vcmp.ne.s32.totalorder %v135, 0
    %vm475 = vcmp.ne.s32.totalorder %v136, 0
    %vm476 = vcmp.ne.s32.totalorder %v137, 0
    %vm477 = vcmp.ne.s32.totalorder %v138, 0
    %vm478 = vcmp.ne.s32.totalorder %v139, 0
    %vm479 = vcmp.ne.s32.totalorder %v140, 0
    %vm480 = vcmp.ne.s32.totalorder %v141, 0
    %vm481 = vcmp.ne.s32.totalorder %v142, 0
    %v482 = vsel %vm466, 1, 0
    %v483 = vsel %vm467, 1, 0
    %v484 = vsel %vm468, 1, 0
    %v485 = vsel %vm469, 1, 0
    %v486 = vsel %vm470, 1, 0
    %v487 = vsel %vm471, 1, 0
    %v488 = vsel %vm472, 1, 0
    %v489 = vsel %vm473, 1, 0
    %v490 = vsel %vm474, 1, 0
    %v491 = vsel %vm475, 1, 0
    %v492 = vsel %vm476, 1, 0
    %v493 = vsel %vm477, 1, 0
    %v494 = vsel %vm478, 1, 0
    %v495 = vsel %vm479, 1, 0
    %v496 = vsel %vm480, 1, 0
    %v497 = vsel %vm481, 1, 0
    %v498 = vcvt.s32.f32 %v482
    %v499 = vcvt.s32.f32 %v483
    %v500 = vcvt.s32.f32 %v484
    %v501 = vcvt.s32.f32 %v485
    %v502 = vcvt.s32.f32 %v486
    %v503 = vcvt.s32.f32 %v487
    %v504 = vcvt.s32.f32 %v488
    %v505 = vcvt.s32.f32 %v489
    %v506 = vcvt.s32.f32 %v490
    %v507 = vcvt.s32.f32 %v491
    %v508 = vcvt.s32.f32 %v492
    %v509 = vcvt.s32.f32 %v493
    %v510 = vcvt.s32.f32 %v494
    %v511 = vcvt.s32.f32 %v495
    %v512 = vcvt.s32.f32 %v496
    %v513 = vcvt.s32.f32 %v497
    %v514 = vld [vmem:[#allocation2] sm:$0x1]
    %v515 = vmul.f32 %v450, %v498
    %v516 = vmul.f32 %v451, %v499
    %v517 = vmul.f32 %v452, %v500
    %v518 = vmul.f32 %v453, %v501
    %v519 = vmul.f32 %v454, %v502
    %v520 = vmul.f32 %v455, %v503
    %v521 = vmul.f32 %v456, %v504
    %v522 = vmul.f32 %v457, %v505
    %v523 = vmul.f32 %v458, %v506
    %v524 = vmul.f32 %v459, %v507
    %v525 = vmul.f32 %v460, %v508
    %v526 = vmul.f32 %v461, %v509
    %v527 = vmul.f32 %v462, %v510
    %v528 = vmul.f32 %v463, %v511
    %v529 = vmul.f32 %v464, %v512
    %v530 = vmul.f32 %v465, %v513
    %vm531 = vcmask 7168
    %v532 = vsel %vm531, %v515, 0.0
    %v533 = vsel %vm531, %v516, 0.0
    %v534 = vadd.f32 %v532, %v533
    %v535 = vsel %vm531, %v517, 0.0
    %v536 = vadd.f32 %v534, %v535
    %v537 = vsel %vm531, %v518, 0.0
    %v538 = vadd.f32 %v536, %v537
    %v539 = vsel %vm531, %v519, 0.0
    %v540 = vadd.f32 %v538, %v539
    %v541 = vsel %vm531, %v520, 0.0
    %v542 = vadd.f32 %v540, %v541
    %v543 = vsel %vm531, %v521, 0.0
    %v544 = vadd.f32 %v542, %v543
    %v545 = vsel %vm531, %v522, 0.0
    %v546 = vadd.f32 %v544, %v545
    %v547 = vsel %vm531, %v523, 0.0
    %v548 = vadd.f32 %v546, %v547
    %v549 = vsel %vm531, %v524, 0.0
    %v550 = vadd.f32 %v548, %v549
    %v551 = vsel %vm531, %v525, 0.0
    %v552 = vadd.f32 %v550, %v551
    %v553 = vsel %vm531, %v526, 0.0
    %v554 = vadd.f32 %v552, %v553
    %v555 = vsel %vm531, %v527, 0.0
    %v556 = vadd.f32 %v554, %v555
    %v557 = vsel %vm531, %v528, 0.0
    %v558 = vadd.f32 %v556, %v557
    %v559 = vsel %vm531, %v529, 0.0
    %v560 = vadd.f32 %v558, %v559
    %v561 = vsel %vm531, %v530, 0.0
    %v562 = vadd.f32 %v560, %v561
    %563 = vadd.xlane.f32.xlu0 %v562
    %v564 = vpop.xlane.xlu0 %563
    %v565 = vrot.slane %v564, 4
    %v566 = vadd.f32 %v564, %v565
    %v567 = vrot.slane %v566, 2
    %v568 = vadd.f32 %v566, %v567
    %v569 = vrot.slane %v568, 1
    %v570 = vadd.f32 %v568, %v569
    %s571 = vtos %v570
    %v572 = vstv %s571
    %v573 = vadd.f32 %v514, %v572
    %vm574 = vcmask 0
    %575 = vst.msk [vmem:[#allocation2] sm:$0x1] %vm574, %v573
    %v576 = vld [vmem:[#allocation4] sm:$0x1]
    %v577 = vsel %vm531, %v498, 0.0
    %v578 = vsel %vm531, %v499, 0.0
    %v579 = vadd.f32 %v577, %v578
    %v580 = vsel %vm531, %v500, 0.0
    %v581 = vadd.f32 %v579, %v580
    %v582 = vsel %vm531, %v501, 0.0
    %v583 = vadd.f32 %v581, %v582
    %v584 = vsel %vm531, %v502, 0.0
    %v585 = vadd.f32 %v583, %v584
    %v586 = vsel %vm531, %v503, 0.0
    %v587 = vadd.f32 %v585, %v586
    %v588 = vsel %vm531, %v504, 0.0
    %v589 = vadd.f32 %v587, %v588
    %v590 = vsel %vm531, %v505, 0.0
    %v591 = vadd.f32 %v589, %v590
    %v592 = vsel %vm531, %v506, 0.0
    %v593 = vadd.f32 %v591, %v592
    %v594 = vsel %vm531, %v507, 0.0
    %v595 = vadd.f32 %v593, %v594
    %v596 = vsel %vm531, %v508, 0.0
    %v597 = vadd.f32 %v595, %v596
    %v598 = vsel %vm531, %v509, 0.0
    %v599 = vadd.f32 %v597, %v598
    %v600 = vsel %vm531, %v510, 0.0
    %v601 = vadd.f32 %v599, %v600
    %v602 = vsel %vm531, %v511, 0.0
    %v603 = vadd.f32 %v601, %v602
    %v604 = vsel %vm531, %v512, 0.0
    %v605 = vadd.f32 %v603, %v604
    %v606 = vsel %vm531, %v513, 0.0
    %v607 = vadd.f32 %v605, %v606
    %608 = vadd.xlane.f32.xlu0 %v607
    %v609 = vpop.xlane.xlu0 %608
    %v610 = vrot.slane %v609, 4
    %v611 = vadd.f32 %v609, %v610
    %v612 = vrot.slane %v611, 2
    %v613 = vadd.f32 %v611, %v612
    %v614 = vrot.slane %v613, 1
    %v615 = vadd.f32 %v613, %v614
    %s616 = vtos %v615
    %v617 = vstv %s616
    %v618 = vadd.f32 %v576, %v617
    %619 = vst.msk [vmem:[#allocation4] sm:$0x1] %vm574, %v618
    %v620 = vld [vmem:[%s93] sm:$0xf]
    %v621 = vld [vmem:[%s99] sm:$0xf]
    %vm622 = vcmp.ne.f32.partialorder %v621, 0.0
    %v623 = vsel %vm622, 1, 0
    %v624 = vcvt.s32.f32 %v623
    %vm625 = vcmask 1043456
    %v626 = vsel %vm625, %v624, -inf
    %v627 = vrot.slane %v626, 4
    %v628 = vmax.f32 %v626, %v627
    %v629 = vrot.slane %v628, 2
    %v630 = vmax.f32 %v628, %v629
    %v631 = vrot.slane %v630, 1
    %v632 = vmax.f32 %v630, %v631
    %v633 = vsub.f32 %v620, %v621
    %v634 = vmul.f32 %v633, %v632
    %v635 = vand.u32 2147483647, %v634
    %vm636 = vcmp.lt.f32.partialorder %v635, 1.0
    %v637 = vmul.f32 %v634, 0.5
    %v638 = vmul.f32 %v637, %v634
    %v639 = vsub.f32 %v635, 0.5
    %v640 = vsel %vm636, %v638, %v639
    %v641 = vld [vmem:[%s7] sm:$0xf]
    %v642 = vsel %vm625, %v640, 0.0
    %643 = vadd.xlane.f32.xlu0 %v642
    %v644 = vpop.xlane.xlu0 %643
    %v645 = vadd.f32 %v641, %v644
    %vm646 = vcmask 3072
    %647 = vst.msk [vmem:[%s7] sm:$0xf] %vm646, %v645
    %v648 = vld [vmem:[#allocation6] sm:$0x1]
    %vm649 = vcmask 1040384
    %v650 = vsel %vm649, %v632, 0.0
    %651 = vadd.xlane.f32.xlu0 %v650
    %v652 = vpop.xlane.xlu0 %651
    %v653 = vrot.slane %v652, 4
    %v654 = vadd.f32 %v652, %v653
    %v655 = vrot.slane %v654, 2
    %v656 = vadd.f32 %v654, %v655
    %v657 = vrot.slane %v656, 1
    %v658 = vadd.f32 %v656, %v657
    %s659 = vtos %v658
    %v660 = vstv %s659
    %v661 = vadd.f32 %v648, %v660
    %662 = vst.msk [vmem:[#allocation6] sm:$0x1] %vm574, %v661
    // Predicated region
    $region22: #{tpu_custom_call.1} parent=1 // pred_check
      _
    $region23: #{tpu_custom_call.1} parent=1 // pred_check_branch
      %664 = sbr.rel (0) target = $region25
    $region24: #{tpu_custom_call.1} parent=1 // pred_region
      %666 = vsyncadd [#allocation3], 0
      %s668 = sshll.u32 [#allocation2], 4
      %s669 = int_to_ptr.vmem [resolvable:$true] %s668
      %s670 = sshll.u32 %s4, 4
      %s671 = int_to_ptr.hbm [resolvable:$true] %s670
      %673 = dma.vmem_to_hbm [thread:$0]  %s669, 16, %s671, [#allocation3]
    $region25: #{tpu_custom_call.1} parent=1 // pred_fallthru
      _
    // Predicated region
    $region26: #{tpu_custom_call.1} parent=1 // pred_check
      _
    $region27: #{tpu_custom_call.1} parent=1 // pred_check_branch
      %675 = sbr.rel (0) target = $region29
    $region28: #{tpu_custom_call.1} parent=1 // pred_region
      %677 = vsyncadd [#allocation5], 0
      %s679 = sshll.u32 [#allocation4], 4
      %s680 = int_to_ptr.vmem [resolvable:$true] %s679
      %s681 = sshll.u32 %s5, 4
      %s682 = int_to_ptr.hbm [resolvable:$true] %s681
      %684 = dma.vmem_to_hbm [thread:$0]  %s680, 16, %s682, [#allocation5]
    $region29: #{tpu_custom_call.1} parent=1 // pred_fallthru
      _
    // Predicated region
    $region30: #{tpu_custom_call.1} parent=1 // pred_check
      _
    $region31: #{tpu_custom_call.1} parent=1 // pred_check_branch
      %686 = sbr.rel (0) target = $region33
    $region32: #{tpu_custom_call.1} parent=1 // pred_region
      %688 = vsyncadd [#allocation5], 0
      %s690 = sshll.u32 [#allocation6], 4
      %s691 = int_to_ptr.vmem [resolvable:$true] %s690
      %s692 = sshll.u32 %s6, 4
      %s693 = int_to_ptr.hbm [resolvable:$true] %s692
      %695 = dma.vmem_to_hbm [thread:$0]  %s691, 16, %s693, [#allocation5]
    $region33: #{tpu_custom_call.1} parent=1 // pred_fallthru
      _
    // Predicated region
    $region34: #{tpu_custom_call.1} parent=1 // pred_check
      _
    $region35: #{tpu_custom_call.1} parent=1 // pred_check_branch
      %697 = sbr.rel (0) target = $region37
    $region36: #{tpu_custom_call.1} parent=1 // pred_region
      _
    $region37: #{tpu_custom_call.1} parent=1 // pred_fallthru
      _
    // Predicated region
    $region38: #{tpu_custom_call.1} parent=1 // pred_check
      _
    $region39: #{tpu_custom_call.1} parent=1 // pred_check_branch
      %699 = sbr.rel (0) target = $region41
    $region40: #{tpu_custom_call.1} parent=1 // pred_region
      %701 = dma.done [#allocation3], 16
    $region41: #{tpu_custom_call.1} parent=1 // pred_fallthru
      _
    // Predicated region
    $region42: #{tpu_custom_call.1} parent=1 // pred_check
      _
    $region43: #{tpu_custom_call.1} parent=1 // pred_check_branch
      %703 = sbr.rel (0) target = $region45
    $region44: #{tpu_custom_call.1} parent=1 // pred_region
      %705 = dma.done [#allocation5], 16
    $region45: #{tpu_custom_call.1} parent=1 // pred_fallthru
      _
    // Predicated region
    $region46: #{tpu_custom_call.1} parent=1 // pred_check
      _
    $region47: #{tpu_custom_call.1} parent=1 // pred_check_branch
      %707 = sbr.rel (0) target = $region49
    $region48: #{tpu_custom_call.1} parent=1 // pred_region
      %709 = dma.done [#allocation5], 16
    $region49: #{tpu_custom_call.1} parent=1 // pred_fallthru
      _
    // Predicated region
    $region50: #{tpu_custom_call.1} parent=1 // pred_check
      _
    $region51: #{tpu_custom_call.1} parent=1 // pred_check_branch
      %711 = sbr.rel (0) target = $region53
    $region52: #{tpu_custom_call.1} parent=1 // pred_region
      _
    $region53: #{tpu_custom_call.1} parent=1 // pred_fallthru
      _
    %712 = vsyncpa [#allocation3], 1
    %713 = vsyncpa [#allocation5], 1

</llo_original>
